<compile_context>
chip_gen: v7x
topology: tpu7x:2x2x1
jax: 0.10.0
libtpu: 0.0.40
codegen_flags: <defaults>
</compile_context>

<pallas_src>
import functools

import jax
import jax.numpy as jnp
from jax.experimental import pallas as pl
from jax.experimental.pallas import tpu as pltpu


# --------------------------------------------------------------------------
# Kernels
# --------------------------------------------------------------------------

def _resblock_kernel(x_ref, w_ref, b_ref, h_out_ref, hcur_ref, hnext_ref,
                     *, num_layers, tile_h):
    # Grid: (head, layer, out-column tile).
    #   x_ref:     (B, H)              input activations (resident)
    #   w_ref:     (1, 1, H, tile_h)   ResBlock weight tile ([in, out] layout)
    #   b_ref:     (1, 1, 1, tile_h)   ResBlock bias tile (f32)
    #   h_out_ref: (1, B, H)           per-head final hidden state (weight dtype)
    #   hcur_ref:  (B, H) f32 scratch  current layer input
    #   hnext_ref: (B, H) f32 scratch  current layer output (built tile by tile)
    l = pl.program_id(1)
    t = pl.program_id(2)
    nt = pl.num_programs(2)

    @pl.when((l == 0) & (t == 0))
    def _init():
        hcur_ref[...] = x_ref[...].astype(jnp.float32)

    start = pl.multiple_of(t * tile_h, tile_h)
    z = jnp.dot(hcur_ref[...].astype(w_ref.dtype), w_ref[0, 0],
                preferred_element_type=jnp.float32)
    z = z + b_ref[0, 0]                      # (B, tile_h) + (1, tile_h), f32
    hnext_ref[:, pl.ds(start, tile_h)] = (
        hcur_ref[:, pl.ds(start, tile_h)] + jax.nn.silu(z))

    @pl.when(t == nt - 1)
    def _advance_layer():
        hcur_ref[...] = hnext_ref[...]

    @pl.when((l == num_layers - 1) & (t == nt - 1))
    def _write_out():
        h_out_ref[0] = hnext_ref[...].astype(h_out_ref.dtype)


def _proj_kernel(h_ref, w_ref, out_ref):
    # Grid: (head, vocab tile).
    #   h_ref:   (1, B, H)        precomputed hidden state of this head (wdtype)
    #   w_ref:   (1, H, tile_n)   vocab tile of this head's projection weight
    #   out_ref: (B, tile_n)      lane-dense output tile (final layout)
    out_ref[...] = jnp.dot(h_ref[0], w_ref[0],
                           preferred_element_type=jnp.float32).astype(out_ref.dtype)


# --------------------------------------------------------------------------
# Tile / VMEM budgeting
# --------------------------------------------------------------------------

def _vmem_limit_bytes(default=64 * 1024 * 1024):
    """Generation-aware VMEM limit with ~25% headroom for compiler scratch.
    v5e/v6e (128 MiB) -> ~96 MiB; v7x (64 MiB) -> ~48 MiB."""
    try:
        cap = int(pltpu.get_tpu_info().vmem_capacity_bytes)
        return (cap * 3) // 4
    except Exception:
        return default


def _largest_div_tile(total, max_tile):
    """Largest multiple-of-128 divisor of `total` that is <= max_tile
    (falls back to 128, or `total` if it is not 128-aligned)."""
    if total % 128 != 0:
        return total
    best = 128
    t = 128
    limit = min(total, max(int(max_tile), 128))
    while t <= limit:
        if total % t == 0:
            best = t
        t += 128
    return best


def _pick_tile_n(Vp, H, B, w_isz, out_isz, vmem_limit):
    """Vocab tile for the projection kernel, sized against the actual limit
    minus resident bytes (double-buffered hidden-state block)."""
    resident = 2 * B * H * w_isz                       # h_all block x2 buffers
    avail = max(vmem_limit - resident, 0)
    denom = 2 * (H * w_isz + B * out_isz)              # weight + out tile, x2 buffers
    return _largest_div_tile(Vp, avail // max(denom, 1))


def _pick_tile_h(H, B, w_isz, vmem_limit):
    """Output-column tile for the ResBlock kernel's H x H weight stream."""
    resident = 2 * B * H * 4            # x block (f32) x2 buffers
    resident += 2 * B * H * w_isz       # h_out block x2 buffers
    resident += 2 * B * H * 4           # hcur + hnext scratch
    avail = max(vmem_limit - resident, 0)
    denom = 2 * (H * w_isz + 4)         # weight column tile + bias tile, x2 buffers
    return _largest_div_tile(H, avail // max(denom, 1))


# --------------------------------------------------------------------------
# Weight preparation (one-time, at load)
# --------------------------------------------------------------------------

def prepare_medusa_weights(lm_head_w, res_w, res_b, out_w,
                           weight_dtype=jnp.bfloat16):
    """
    lm_head_w: [V, H]              torch Linear layout [out, in]
    res_w:     [n_heads, L, H, H]  torch layout [out, in] per ResBlock
    res_b:     [n_heads, L, H]
    out_w:     [n_heads, V, H]     torch layout [out, in]
    Returns (wall_t [n_heads+1, H, Vp], wres_t [n_heads, L, H, H],
             bres [n_heads, L, 1, H] f32, V) with lm_head fused as head 0 and
    the vocab dim zero-padded to a multiple of 128.
    """
    V, _H = lm_head_w.shape
    n_heads, L = res_w.shape[0], res_w.shape[1]
    lm_t = jnp.transpose(lm_head_w, (1, 0))[None]      # [1, H, V]
    out_t = jnp.transpose(out_w, (0, 2, 1))            # [n_heads, H, V]
    wall_t = jnp.concatenate([lm_t, out_t], axis=0).astype(weight_dtype)
    Vp = ((V + 127) // 128) * 128
    if Vp != V:
        wall_t = jnp.pad(wall_t, ((0, 0), (0, 0), (0, Vp - V)))
    wres_t = jnp.transpose(res_w, (0, 1, 3, 2)).astype(weight_dtype)   # [in, out]
    bres = res_b.astype(jnp.float32).reshape(n_heads, L, 1, -1)        # f32 (torch parity)
    return wall_t, wres_t, bres, V


# --------------------------------------------------------------------------
# Forward
# --------------------------------------------------------------------------

def medusa_v1_forward(x, wall_t, wres_t, bres, *, vocab_size=None,
                      tile_n=None, tile_h=None):
    """
    x:      [B, H] activations
    wall_t: [n_heads+1, H, Vp]   head 0 = lm_head weight^T, 1.. = head out-projections
    wres_t: [n_heads, L, H, H]   ResBlock weights ([in, out])
    bres:   [n_heads, L, 1, H]   ResBlock biases (f32)
    returns (logits [B, V], speculative_logits [B, n_heads, V])
    """
    B, H = x.shape
    n_all, _, Vp = wall_t.shape
    n_heads = n_all - 1
    L = wres_t.shape[1]
    wdtype = wall_t.dtype
    w_isz = jnp.dtype(wdtype).itemsize
    out_isz = jnp.dtype(x.dtype).itemsize
    if vocab_size is None:
        vocab_size = Vp
    vmem_limit = _vmem_limit_bytes()

    # ---------------- Stage 1: ResBlock hidden states (tiny compute) -------
    if tile_h is None:
        tile_h = _pick_tile_h(H, B, w_isz, vmem_limit)
    assert H % tile_h == 0, "hidden tile must divide H"
    nt = H // tile_h

    res_cost = pl.CostEstimate(
        flops=2 * B * H * H * L * n_heads,
        transcendentals=n_heads * L * B * H,
        bytes_accessed=(n_heads * L * (H * H * w_isz + H * 4)
                        + B * H * out_isz + n_heads * B * H * w_isz))

    h_heads = pl.pallas_call(
        functools.partial(_resblock_kernel, num_layers=L, tile_h=tile_h),
        out_shape=jax.ShapeDtypeStruct((n_heads, B, H), wdtype),
        grid_spec=pltpu.PrefetchScalarGridSpec(
            num_scalar_prefetch=0,
            grid=(n_heads, L, nt),
            in_specs=[
                # x resident across the whole grid.
                pl.BlockSpec((B, H), lambda hd, l, t: (0, 0)),
                # ResBlock weight, streamed in output-column tiles.
                pl.BlockSpec((1, 1, H, tile_h), lambda hd, l, t: (hd, l, 0, t)),
                # Bias tile (f32).
                pl.BlockSpec((1, 1, 1, tile_h), lambda hd, l, t: (hd, l, 0, t)),
            ],
            out_specs=pl.BlockSpec((1, B, H), lambda hd, l, t: (hd, 0, 0)),
            scratch_shapes=[pltpu.VMEM((B, H), jnp.float32),
                            pltpu.VMEM((B, H), jnp.float32)],
        ),
        compiler_params=pltpu.CompilerParams(
            dimension_semantics=("parallel", "arbitrary", "arbitrary"),
            vmem_limit_bytes=vmem_limit),
        cost_estimate=res_cost,
    )(x, wres_t, bres)

    # Head 0 (base lm_head) projects x directly; cast once to the weight dtype.
    h_all = jnp.concatenate([x.astype(wdtype)[None], h_heads], axis=0)  # (n_all, B, H)

    # ---------------- Stage 2: vocab-streaming projection ------------------
    if tile_n is None:
        tile_n = _pick_tile_n(Vp, H, B, w_isz, out_isz, vmem_limit)
    assert Vp % tile_n == 0, "vocab tile must divide padded V"
    nj = Vp // tile_n

    proj_cost = pl.CostEstimate(
        flops=2 * B * H * Vp * n_all,
        transcendentals=0,
        bytes_accessed=(n_all * H * Vp * w_isz        # projection weights (dominant)
                        + n_all * B * H * w_isz       # hidden states
                        + B * n_all * Vp * out_isz))  # logits out

    out = pl.pallas_call(
        _proj_kernel,
        out_shape=jax.ShapeDtypeStruct((B, n_all * Vp), x.dtype),
        grid_spec=pltpu.PrefetchScalarGridSpec(
            num_scalar_prefetch=0,
            grid=(n_all, nj),  # (head, vocab tile)
            in_specs=[
                pl.BlockSpec((1, B, H), lambda h, j: (h, 0, 0)),
                pl.BlockSpec((1, H, tile_n), lambda h, j: (h, 0, j)),
            ],
            # Write directly into the final [B, (n_heads+1)*Vp] layout.
            out_specs=pl.BlockSpec((B, tile_n), lambda h, j: (0, h * nj + j)),
        ),
        compiler_params=pltpu.CompilerParams(
            # No cross-iteration scratch: both axes parallel (fine-grained
            # megacore load-balance on v7x; no-op on single-TC v5e/v6e).
            dimension_semantics=("parallel", "parallel"),
            vmem_limit_bytes=vmem_limit),
        cost_estimate=proj_cost,
    )(h_all, wall_t)

    out3 = out.reshape(B, n_all, Vp)          # free reshape (row-major contiguous)
    logits = out3[:, 0, :vocab_size]          # [B, V]
    speculative_logits = out3[:, 1:, :vocab_size]   # [B, n_heads, V] (torch.stack dim=1)
    return logits, speculative_logits


# --------------------------------------------------------------------------
# Pure-JAX reference (mirrors kernel precision: wdtype matmul inputs, f32
# accumulation/residual, f32 bias)
# --------------------------------------------------------------------------

def _reference(x, wall_t, wres_t, bres, vocab_size):
    wd = wall_t.dtype
    n_heads = wall_t.shape[0] - 1
    L = wres_t.shape[1]

    def mm(a, w):
        return jnp.dot(a.astype(wd), w, preferred_element_type=jnp.float32)

    logits = mm(x, wall_t[0]).astype(x.dtype)[:, :vocab_size]
    heads = []
    for hd in range(n_heads):
        h = x.astype(jnp.float32)
        for l in range(L):
            z = mm(h, wres_t[hd, l]) + bres[hd, l, 0][None, :]
            h = h + jax.nn.silu(z)
        heads.append(mm(h, wall_t[hd + 1]).astype(x.dtype)[:, :vocab_size])
    return logits, jnp.stack(heads, axis=1)


# --------------------------------------------------------------------------
# Self-test
# --------------------------------------------------------------------------

if __name__ == "__main__":
    key = jax.random.PRNGKey(0)

    # --- Config 1: bf16 weights, multi-tile grids exercised -----------------
    B, H, V = 8, 256, 1024
    N_HEADS, N_LAYERS = 3, 2
    k_x, k_lm, k_wr, k_br, k_wo, key = jax.random.split(key, 6)
    x = jax.random.normal(k_x, (B, H), dtype=jnp.float32)
    lm_w = jax.random.normal(k_lm, (V, H), dtype=jnp.float32) * 0.02
    res_w = jax.random.normal(k_wr, (N_HEADS, N_LAYERS, H, H), dtype=jnp.float32) * 0.02
    res_b = jax.random.normal(k_br, (N_HEADS, N_LAYERS, H), dtype=jnp.float32) * 0.02
    out_w = jax.random.normal(k_wo, (N_HEADS, V, H), dtype=jnp.float32) * 0.02

    wall_bf, wres_bf, bres_bf, v0 = prepare_medusa_weights(
        lm_w, res_w, res_b, out_w, weight_dtype=jnp.bfloat16)
    fwd_bf = jax.jit(functools.partial(medusa_v1_forward, vocab_size=v0,
                                       tile_n=256, tile_h=128))
    logits, spec_logits = fwd_bf(x, wall_bf, wres_bf, bres_bf)
    jax.block_until_ready((logits, spec_logits))

    ref_logits, ref_spec = _reference(x, wall_bf, wres_bf, bres_bf, v0)
    assert logits.shape == (B, V)
    assert spec_logits.shape == (B, N_HEADS, V)
    assert jnp.allclose(logits, ref_logits, atol=2e-3, rtol=2e-3), \
        float(jnp.max(jnp.abs(logits - ref_logits)))
    assert jnp.allclose(spec_logits, ref_spec, atol=2e-3, rtol=2e-3), \
        float(jnp.max(jnp.abs(spec_logits - ref_spec)))

    # --- Config 2: f32 weights, non-128-aligned vocab (padding path), auto tiles
    B2, H2, V2 = 4, 256, 1000
    N_HEADS2, N_LAYERS2 = 2, 1
    k_x2, k_lm2, k_wr2, k_br2, k_wo2, key = jax.random.split(key, 6)
    x2 = jax.random.normal(k_x2, (B2, H2), dtype=jnp.float32)
    lm_w2 = jax.random.normal(k_lm2, (V2, H2), dtype=jnp.float32) * 0.02
    res_w2 = jax.random.normal(k_wr2, (N_HEADS2, N_LAYERS2, H2, H2), dtype=jnp.float32) * 0.02
    res_b2 = jax.random.normal(k_br2, (N_HEADS2, N_LAYERS2, H2), dtype=jnp.float32) * 0.02
    out_w2 = jax.random.normal(k_wo2, (N_HEADS2, V2, H2), dtype=jnp.float32) * 0.02

    wall_f32, wres_f32, bres_f32, v1 = prepare_medusa_weights(
        lm_w2, res_w2, res_b2, out_w2, weight_dtype=jnp.float32)
    fwd_f32 = jax.jit(functools.partial(medusa_v1_forward, vocab_size=v1))
    logits32, spec32 = fwd_f32(x2, wall_f32, wres_f32, bres_f32)
    jax.block_until_ready((logits32, spec32))

    ref_logits32, ref_spec32 = _reference(x2, wall_f32, wres_f32, bres_f32, v1)
    assert logits32.shape == (B2, V2)
    assert spec32.shape == (B2, N_HEADS2, V2)
    assert jnp.allclose(logits32, ref_logits32, atol=1e-4, rtol=1e-4), \
        float(jnp.max(jnp.abs(logits32 - ref_logits32)))
    assert jnp.allclose(spec32, ref_spec32, atol=1e-4, rtol=1e-4), \
        float(jnp.max(jnp.abs(spec32 - ref_spec32)))

    print("KERNEL_OK")
</pallas_src>

<mosaic_0001>
module attributes {stable_mosaic.version = 11 : i64} {
  func.func @_proj_kernel(%arg0: i32, %arg1: i32, %arg2: memref<1x8x256xbf16, #tpu.memory_space<vmem>>, %arg3: memref<1x256x256xbf16, #tpu.memory_space<vmem>>, %arg4: memref<8x256xf32, #tpu.memory_space<vmem>>) attributes {dimension_semantics = [#tpu.dimension_semantics<parallel>, #tpu.dimension_semantics<parallel>], iteration_bounds = array<i64: 4, 4>, scalar_prefetch = 0 : i64, scratch_operands = 0 : i64, tpu.core_type = #tpu.core_type<tc>, window_params = [{transform_indices = @transform_0, window_bounds = array<i64: 1, 8, 256>}, {transform_indices = @transform_1, window_bounds = array<i64: 1, 256, 256>}, {transform_indices = @transform_2, window_bounds = array<i64: 8, 256>}]} {
    %c0 = arith.constant 0 : index
    %c0_0 = arith.constant 0 : index
    %c0_1 = arith.constant 0 : index
    %0 = vector.load %arg2[%c0, %c0_0, %c0_1] : memref<1x8x256xbf16, #tpu.memory_space<vmem>>, vector<1x8x256xbf16>
    %1 = vector.shape_cast %0 : vector<1x8x256xbf16> to vector<8x256xbf16>
    %c0_2 = arith.constant 0 : index
    %c0_3 = arith.constant 0 : index
    %c0_4 = arith.constant 0 : index
    %2 = vector.load %arg3[%c0_2, %c0_3, %c0_4] : memref<1x256x256xbf16, #tpu.memory_space<vmem>>, vector<1x256x256xbf16>
    %3 = vector.shape_cast %2 : vector<1x256x256xbf16> to vector<256x256xbf16>
    %cst = arith.constant dense<0.000000e+00> : vector<8x256xf32>
    %4 = tpu.matmul %1, %3, %cst {dimension_numbers = #tpu.dot_dimension_numbers<[1], [0], [0], [1], [0, 0, 1, 1], [], []>} : vector<8x256xbf16>, vector<256x256xbf16>, vector<8x256xf32> -> vector<8x256xf32>
    %c0_5 = arith.constant 0 : index
    %c0_6 = arith.constant 0 : index
    %5 = vector.load %arg4[%c0_5, %c0_6] : memref<8x256xf32, #tpu.memory_space<vmem>>, vector<8x256xf32>
    tpu.vector_store %arg4[%c0_5, %c0_6], %4 {strides = array<i32>} : memref<8x256xf32, #tpu.memory_space<vmem>>, vector<8x256xf32>,
    return
  }
  func.func @transform_0(%arg0: i32, %arg1: i32) -> (i32, i32, i32) {
    %c0_i32 = arith.constant 0 : i32
    %c0_i32_0 = arith.constant 0 : i32
    %c0_i32_1 = arith.constant 0 : i32
    return %arg0, %c0_i32, %c0_i32_0 : i32, i32, i32
  }
  func.func @transform_1(%arg0: i32, %arg1: i32) -> (i32, i32, i32) {
    %c0_i32 = arith.constant 0 : i32
    %c0_i32_0 = arith.constant 0 : i32
    return %arg0, %c0_i32, %arg1 : i32, i32, i32
  }
  func.func @transform_2(%arg0: i32, %arg1: i32) -> (i32, i32) {
    %c4_i32 = arith.constant 4 : i32
    %0 = arith.muli %arg0, %c4_i32 : i32
    %1 = arith.addi %0, %arg1 : i32
    %c0_i32 = arith.constant 0 : i32
    %c0_i32_0 = arith.constant 0 : i32
    return %c0_i32, %1 : i32, i32
  }
}

module attributes {stable_mosaic.version = 11 : i64} {
  func.func @_resblock_kernel(%arg0: i32, %arg1: i32, %arg2: i32, %arg3: memref<8x256xf32, #tpu.memory_space<vmem>>, %arg4: memref<1x1x256x128xbf16, #tpu.memory_space<vmem>>, %arg5: memref<1x1x1x128xf32, #tpu.memory_space<vmem>>, %arg6: memref<1x8x256xbf16, #tpu.memory_space<vmem>>, %arg7: memref<8x256xf32, #tpu.memory_space<vmem>>, %arg8: memref<8x256xf32, #tpu.memory_space<vmem>>) attributes {dimension_semantics = [#tpu.dimension_semantics<parallel>, #tpu.dimension_semantics<arbitrary>, #tpu.dimension_semantics<arbitrary>], iteration_bounds = array<i64: 3, 2, 2>, scalar_prefetch = 0 : i64, scratch_operands = 2 : i64, tpu.core_type = #tpu.core_type<tc>, window_params = [{pipeline_mode = #tpu.pipeline_mode<synchronous>, transform_indices = @transform_0, window_bounds = array<i64: 8, 256>}, {transform_indices = @transform_1, window_bounds = array<i64: 1, 1, 256, 128>}, {transform_indices = @transform_2, window_bounds = array<i64: 1, 1, 1, 128>}, {transform_indices = @transform_3, window_bounds = array<i64: 1, 8, 256>}]} {
    %c0_i32 = arith.constant 0 : i32
    %0 = arith.cmpi eq, %arg1, %c0_i32 : i32
    %c0_i32_0 = arith.constant 0 : i32
    %1 = arith.cmpi eq, %arg2, %c0_i32_0 : i32
    %2 = arith.andi %0, %1 : i1
    %3 = arith.extui %2 : i1 to i32
    %c0_i32_1 = arith.constant 0 : i32
    %4 = arith.cmpi ne, %3, %c0_i32_1 : i32
    scf.if %4 {
      %c0_18 = arith.constant 0 : index
      %c0_19 = arith.constant 0 : index
      %35 = vector.load %arg3[%c0_18, %c0_19] : memref<8x256xf32, #tpu.memory_space<vmem>>, vector<8x256xf32>
      %c0_20 = arith.constant 0 : index
      %c0_21 = arith.constant 0 : index
      %36 = vector.load %arg7[%c0_20, %c0_21] : memref<8x256xf32, #tpu.memory_space<vmem>>, vector<8x256xf32>
      tpu.vector_store %arg7[%c0_20, %c0_21], %35 {strides = array<i32>} : memref<8x256xf32, #tpu.memory_space<vmem>>, vector<8x256xf32>,
    } else {
    }
    %c128_i32 = arith.constant 128 : i32
    %5 = arith.muli %arg2, %c128_i32 : i32
    %6 = tpu.assume_multiple %5, 128 : i32
    %c0 = arith.constant 0 : index
    %c0_2 = arith.constant 0 : index
    %7 = vector.load %arg7[%c0, %c0_2] : memref<8x256xf32, #tpu.memory_space<vmem>>, vector<8x256xf32>
    %8 = arith.truncf %7 : vector<8x256xf32> to vector<8x256xbf16>
    %c0_3 = arith.constant 0 : index
    %c0_4 = arith.constant 0 : index
    %c0_5 = arith.constant 0 : index
    %c0_6 = arith.constant 0 : index
    %9 = vector.load %arg4[%c0_3, %c0_4, %c0_5, %c0_6] : memref<1x1x256x128xbf16, #tpu.memory_space<vmem>>, vector<1x1x256x128xbf16>
    %10 = vector.shape_cast %9 : vector<1x1x256x128xbf16> to vector<256x128xbf16>
    %cst = arith.constant dense<0.000000e+00> : vector<8x128xf32>
    %11 = tpu.matmul %8, %10, %cst {dimension_numbers = #tpu.dot_dimension_numbers<[1], [0], [0], [1], [0, 0, 1, 1], [], []>} : vector<8x256xbf16>, vector<256x128xbf16>, vector<8x128xf32> -> vector<8x128xf32>
    %c0_7 = arith.constant 0 : index
    %c0_8 = arith.constant 0 : index
    %c0_9 = arith.constant 0 : index
    %c0_10 = arith.constant 0 : index
    %12 = vector.load %arg5[%c0_7, %c0_8, %c0_9, %c0_10] : memref<1x1x1x128xf32, #tpu.memory_space<vmem>>, vector<1x1x1x128xf32>
    %13 = vector.shape_cast %12 : vector<1x1x1x128xf32> to vector<1x128xf32>
    %14 = vector.broadcast %13 : vector<1x128xf32> to vector<8x128xf32>
    %15 = arith.addf %11, %14 : vector<8x128xf32>
    %c0_11 = arith.constant 0 : index
    %16 = arith.index_cast %6 : i32 to index
    %17 = vector.load %arg7[%c0_11, %16] : memref<8x256xf32, #tpu.memory_space<vmem>>, vector<8x128xf32>
    %18 = arith.negf %15 : vector<8x128xf32>
    %19 = math.exp %18 : vector<8x128xf32>
    %cst_12 = arith.constant 1.000000e+00 : f32
    %20 = vector.broadcast %cst_12 : f32 to vector<8x128xf32>
    %21 = arith.addf %20, %19 : vector<8x128xf32>
    %22 = arith.divf %20, %21 : vector<8x128xf32>
    %23 = arith.mulf %15, %22 : vector<8x128xf32>
    %24 = arith.addf %17, %23 : vector<8x128xf32>
    %c0_13 = arith.constant 0 : index
    %25 = arith.index_cast %6 : i32 to index
    %26 = vector.load %arg8[%c0_13, %25] : memref<8x256xf32, #tpu.memory_space<vmem>>, vector<8x128xf32>
    tpu.vector_store %arg8[%c0_13, %25], %24 {strides = array<i32>} : memref<8x256xf32, #tpu.memory_space<vmem>>, vector<8x128xf32>,
    %c1_i32 = arith.constant 1 : i32
    %27 = arith.cmpi eq, %arg2, %c1_i32 : i32
    %28 = arith.extui %27 : i1 to i32
    %c0_i32_14 = arith.constant 0 : i32
    %29 = arith.cmpi ne, %28, %c0_i32_14 : i32
    scf.if %29 {
      %c0_18 = arith.constant 0 : index
      %c0_19 = arith.constant 0 : index
      %35 = vector.load %arg8[%c0_18, %c0_19] : memref<8x256xf32, #tpu.memory_space<vmem>>, vector<8x256xf32>
      %c0_20 = arith.constant 0 : index
      %c0_21 = arith.constant 0 : index
      %36 = vector.load %arg7[%c0_20, %c0_21] : memref<8x256xf32, #tpu.memory_space<vmem>>, vector<8x256xf32>
      tpu.vector_store %arg7[%c0_20, %c0_21], %35 {strides = array<i32>} : memref<8x256xf32, #tpu.memory_space<vmem>>, vector<8x256xf32>,
    } else {
    }
    %c1_i32_15 = arith.constant 1 : i32
    %30 = arith.cmpi eq, %arg1, %c1_i32_15 : i32
    %c1_i32_16 = arith.constant 1 : i32
    %31 = arith.cmpi eq, %arg2, %c1_i32_16 : i32
    %32 = arith.andi %30, %31 : i1
    %33 = arith.extui %32 : i1 to i32
    %c0_i32_17 = arith.constant 0 : i32
    %34 = arith.cmpi ne, %33, %c0_i32_17 : i32
    scf.if %34 {
      %c0_18 = arith.constant 0 : index
      %c0_19 = arith.constant 0 : index
      %35 = vector.load %arg8[%c0_18, %c0_19] : memref<8x256xf32, #tpu.memory_space<vmem>>, vector<8x256xf32>
      %36 = arith.truncf %35 : vector<8x256xf32> to vector<8x256xbf16>
      %c0_20 = arith.constant 0 : index
      %c0_21 = arith.constant 0 : index
      %c0_22 = arith.constant 0 : index
      %37 = vector.load %arg6[%c0_20, %c0_21, %c0_22] : memref<1x8x256xbf16, #tpu.memory_space<vmem>>, vector<1x8x256xbf16>
      %38 = vector.shape_cast %37 : vector<1x8x256xbf16> to vector<8x256xbf16>
      %39 = vector.shape_cast %36 : vector<8x256xbf16> to vector<1x8x256xbf16>
      tpu.vector_store %arg6[%c0_20, %c0_21, %c0_22], %39 {strides = array<i32>} : memref<1x8x256xbf16, #tpu.memory_space<vmem>>, vector<1x8x256xbf16>,
    } else {
    }
    return
  }
  func.func @transform_0(%arg0: i32, %arg1: i32, %arg2: i32) -> (i32, i32) {
    %c0_i32 = arith.constant 0 : i32
    %c0_i32_0 = arith.constant 0 : i32
    %c0_i32_1 = arith.constant 0 : i32
    return %c0_i32, %c0_i32_0 : i32, i32
  }
  func.func @transform_1(%arg0: i32, %arg1: i32, %arg2: i32) -> (i32, i32, i32, i32) {
    %c0_i32 = arith.constant 0 : i32
    %c0_i32_0 = arith.constant 0 : i32
    return %arg0, %arg1, %c0_i32, %arg2 : i32, i32, i32, i32
  }
  func.func @transform_2(%arg0: i32, %arg1: i32, %arg2: i32) -> (i32, i32, i32, i32) {
    %c0_i32 = arith.constant 0 : i32
    %c0_i32_0 = arith.constant 0 : i32
    return %arg0, %arg1, %c0_i32, %arg2 : i32, i32, i32, i32
  }
  func.func @transform_3(%arg0: i32, %arg1: i32, %arg2: i32) -> (i32, i32, i32) {
    %c0_i32 = arith.constant 0 : i32
    %c0_i32_0 = arith.constant 0 : i32
    %c0_i32_1 = arith.constant 0 : i32
    return %arg0, %c0_i32, %c0_i32_0 : i32, i32, i32
  }
}

</mosaic_0001>

<llo_original>
// kernel: medusa_v1_forward.2
$region0: #{medusa_v1_forward.2}
  #allocation0 [shape = 'u32[]', space=smem, size = 0x4, offset = 0x4, fixed_abs, tag = 'smem constant byte address 0x4 - core index']
  #allocation1 [shape = 'u32[144,128]{1,0:T(1,128)}', space=vmem, size = 0x12000, scoped, tag = 'internal scratch']
  #allocation2 [shape = 'f32[8,256]{1,0:T(8,128)}', space=vmem, size = 0x2000, scoped, tag = 'scratch operand']
  #allocation3 [shape = 'f32[8,256]{1,0:T(8,128)}', space=vmem, size = 0x2000, scoped, tag = 'scratch operand']
  %s0 = inlined_call_operand.hbm [shape: f32[8,256], index: 0, kind: input, shape index: {}]
  %s1 = inlined_call_operand.hbm [shape: bf16[3,2,256,256], index: 1, kind: input, shape index: {}]
  %s2 = inlined_call_operand.hbm [shape: f32[3,2,1,256], index: 2, kind: input, shape index: {}]
  %s3 = inlined_call_operand.hbm [shape: bf16[3,8,256], index: 3, kind: output, shape index: {}]
  %s4 = sld [smem:[#allocation0]]
  $region69: #{medusa_v1_forward.2} parent=0
    _
  %s6 = ssub.s32 1, %s4
  %s7 = scalar_select 0, %s6, %s4
  $region1: #{medusa_v1_forward.2} parent=0
    #allocation4 [shape = 'u8[8192]{0}', space=vmem, size = 0x2000, scoped, tag = 'input window, operand 0, single buffered']
    #allocation5 [shape = 's32[2]{0}', space=sflag, size = 0x8, scoped, tag = 'scoped memory for medusa_v1_forward.2']
    #allocation6 [shape = 's32[2]{0}', space=sflag, size = 0x8, scoped, tag = 'scoped memory for medusa_v1_forward.2']
    #allocation7 [shape = 'u8[131072]{0}', space=vmem, size = 0x20000, scoped, tag = 'input window, operand 1']
    #allocation8 [shape = 's32[2]{0}', space=sflag, size = 0x8, scoped, tag = 'scoped memory for medusa_v1_forward.2']
    #allocation9 [shape = 'u8[1024]{0}', space=vmem, size = 0x400, scoped, tag = 'input window, operand 2']
    #allocation10 [shape = 'u8[8192]{0}', space=vmem, size = 0x2000, scoped, tag = 'output window, operand 0']
    %8 = vsyncpa [#allocation5], 0
    %9 = vsyncpa [#allocation8], 0
    %s10 = scalar_lea.sflag [#allocation8], 1
    %11 = vsyncpa %s10, 0
    %12 = vsyncpa [#allocation6], 0
    %s13 = scalar_lea.sflag [#allocation6], 1
    %14 = vsyncpa %s13, 0
    loop: start=0, step=1, limit=14
    $region2: #{medusa_v1_forward.2} parent=1 // loop_pre_header
      _
    $region3: #{medusa_v1_forward.2} parent=1 // loop_header
      %s16 = sphi 0, %s20
      %p17 = scmp.ge.s32.totalorder %s16, 14
      %s23 = sphi 0, %s42
      %s24 = sphi 0, %s38
      %s25 = sphi 0, %s34
      %s26 = sphi 0, %s23
      %s27 = sphi 0, %s24
      %s28 = sphi 0, %s25
      %s29 = sphi 0, %s26
      %s30 = sphi 0, %s27
      %s31 = sphi 0, %s28
      %s43 = sphi 0, %s43
      %s45 = sphi 0, %s43
      %s46 = sphi 0, %s45
      %s60 = sphi 0, %s46
      %s70 = sphi 0, %s72
      %s73 = sphi 0, %s70
      %s74 = sphi 0, %s73
      %s90 = sphi 0, %s74
      %s100 = sphi 0, %s102
      %s103 = sphi 0, %s100
      %s104 = sphi 0, %s103
      %s120 = sphi 0, %s104
      %s126 = sphi 0, %s128
      %s129 = sphi 0, %s126
      %s130 = sphi 0, %s129
      %s146 = sphi 0, %s130
    $region4: #{medusa_v1_forward.2} parent=1 // loop_header_branch
      %19 = sbr.rel (%p17) target = $region8
    $region5: #{medusa_v1_forward.2} parent=1 // loop_body
      %s21 = ssub.s32 %s16, 1
      %s22 = ssub.s32 %s16, 2
      %s32 = sadd.s32 1, %s25
      %p33 = scmp.ge.s32.totalorder %s32, 2
      %s34 = scalar_select %p33, 0, %s32
      %s35 = sadd.s32 1, %s24
      %s36 = scalar_select %p33, %s35, %s24
      %p37 = scmp.ge.s32.totalorder %s36, 2
      %s38 = scalar_select %p37, 0, %s36
      %s39 = sadd.s32 1, %s23
      %s40 = scalar_select %p37, %s39, %s23
      %p41 = scmp.ge.s32.totalorder %s40, 3
      %s42 = scalar_select %p41, 0, %s40
      %s44 = sadd.s32 %s43, 1
      %p47 = scmp.eq.s32.totalorder %s16, 11
      %p48 = scmp.ne.s32.totalorder %s43, %s45
      %p49 = scmp.eq.s32.totalorder %s16, 0
      %p50 = por %p48, %p49
      %p51 = scmp.ne.s32.totalorder %s43, %s45
      %p52 = scmp.eq.s32.totalorder %s21, 11
      %p53 = por %p51, %p52
      %p54 = scmp.ne.s32.totalorder %s45, %s46
      %p55 = scmp.eq.s32.totalorder %s21, 0
      %p56 = por %p54, %p55
      %p57 = scmp.ne.s32.totalorder %s45, %s46
      %p58 = scmp.eq.s32.totalorder %s22, 11
      %p59 = por %p57, %p58
      %p61 = scmp.ne.s32.totalorder %s46, %s60
      %p62 = scmp.eq.s32.totalorder %s22, 0
      %p63 = por %p61, %p62
      %s64 = ssub.s32 %s23, %s42
      %s65 = ssub.s32 %s24, %s38
      %s66 = sor.u32 %s64, %s65
      %s67 = ssub.s32 %s25, %s34
      %s68 = sor.u32 %s66, %s67
      %p69 = scmp.eq.s32.totalorder %s68, 0
      %s71 = sadd.s32 %s70, 1
      %s72 = scalar_select %p69, %s70, %s71
      %p75 = pneg %p69
      %p76 = scmp.eq.s32.totalorder %s16, 11
      %p77 = por %p75, %p76
      %p78 = scmp.ne.s32.totalorder %s70, %s73
      %p79 = scmp.eq.s32.totalorder %s16, 0
      %p80 = por %p78, %p79
      %p81 = scmp.ne.s32.totalorder %s70, %s73
      %p82 = scmp.eq.s32.totalorder %s21, 11
      %p83 = por %p81, %p82
      %p84 = scmp.ne.s32.totalorder %s73, %s74
      %p85 = scmp.eq.s32.totalorder %s21, 0
      %p86 = por %p84, %p85
      %p87 = scmp.ne.s32.totalorder %s73, %s74
      %p88 = scmp.eq.s32.totalorder %s22, 11
      %p89 = por %p87, %p88
      %p91 = scmp.ne.s32.totalorder %s74, %s90
      %p92 = scmp.eq.s32.totalorder %s22, 0
      %p93 = por %p91, %p92
      %s94 = ssub.s32 %s23, %s42
      %s95 = ssub.s32 %s24, %s38
      %s96 = sor.u32 %s94, %s95
      %s97 = ssub.s32 %s25, %s34
      %s98 = sor.u32 %s96, %s97
      %p99 = scmp.eq.s32.totalorder %s98, 0
      %s101 = sadd.s32 %s100, 1
      %s102 = scalar_select %p99, %s100, %s101
      %p105 = pneg %p99
      %p106 = scmp.eq.s32.totalorder %s16, 11
      %p107 = por %p105, %p106
      %p108 = scmp.ne.s32.totalorder %s100, %s103
      %p109 = scmp.eq.s32.totalorder %s16, 0
      %p110 = por %p108, %p109
      %p111 = scmp.ne.s32.totalorder %s100, %s103
      %p112 = scmp.eq.s32.totalorder %s21, 11
      %p113 = por %p111, %p112
      %p114 = scmp.ne.s32.totalorder %s103, %s104
      %p115 = scmp.eq.s32.totalorder %s21, 0
      %p116 = por %p114, %p115
      %p117 = scmp.ne.s32.totalorder %s103, %s104
      %p118 = scmp.eq.s32.totalorder %s22, 11
      %p119 = por %p117, %p118
      %p121 = scmp.ne.s32.totalorder %s104, %s120
      %p122 = scmp.eq.s32.totalorder %s22, 0
      %p123 = por %p121, %p122
      %s124 = ssub.s32 %s23, %s42
      %p125 = scmp.eq.s32.totalorder %s124, 0
      %s127 = sadd.s32 %s126, 1
      %s128 = scalar_select %p125, %s126, %s127
      %p131 = pneg %p125
      %p132 = scmp.eq.s32.totalorder %s16, 11
      %p133 = por %p131, %p132
      %p134 = scmp.ne.s32.totalorder %s126, %s129
      %p135 = scmp.eq.s32.totalorder %s16, 0
      %p136 = por %p134, %p135
      %p137 = scmp.ne.s32.totalorder %s126, %s129
      %p138 = scmp.eq.s32.totalorder %s21, 11
      %p139 = por %p137, %p138
      %p140 = scmp.ne.s32.totalorder %s129, %s130
      %p141 = scmp.eq.s32.totalorder %s21, 0
      %p142 = por %p140, %p141
      %p143 = scmp.ne.s32.totalorder %s129, %s130
      %p144 = scmp.eq.s32.totalorder %s22, 11
      %p145 = por %p143, %p144
      %p147 = scmp.ne.s32.totalorder %s130, %s146
      %p148 = scmp.eq.s32.totalorder %s22, 0
      %p149 = por %p147, %p148
      %p150 = scmp.le.s32.totalorder 1, %s16
      %p151 = scmp.lt.s32.totalorder %s16, 13
      %p152 = pnand %p150, %p151
      %p153 = pneg %p152
      // Predicated region
      $region9: #{medusa_v1_forward.2} parent=5 // pred_check
        _
      $region10: #{medusa_v1_forward.2} parent=5 // pred_check_branch
        %155 = sbr.rel (%p152) target = $region12
      $region11: #{medusa_v1_forward.2} parent=5 // pred_region
        %s156 = ssub.s32 %s16, 1
        // Predicated region
        $region13: #{medusa_v1_forward.2} parent=11 // pred_check
          %p157 = pneg %p56
        $region14: #{medusa_v1_forward.2} parent=11 // pred_check_branch
          %159 = sbr.rel (%p157) target = $region16
        $region15: #{medusa_v1_forward.2} parent=11 // pred_region
          %s161 = ssub.s32 256, 256
          %162 = vsyncadd [#allocation5], %s161
          %s164 = sshll.u32 [#allocation4], 4
          %s165 = int_to_ptr.vmem [resolvable:$true] %s164
          %167 = dma.hbm_to_vmem [thread:$0]  %s0, 256, %s165, [#allocation5]
        $region16: #{medusa_v1_forward.2} parent=11 // pred_fallthru
          _
      $region12: #{medusa_v1_forward.2} parent=5 // pred_fallthru
        _
      %p168 = scmp.lt.s32.totalorder %s16, 12
      // Predicated region
      $region17: #{medusa_v1_forward.2} parent=5 // pred_check
        %p169 = pneg %p168
      $region18: #{medusa_v1_forward.2} parent=5 // pred_check_branch
        %171 = sbr.rel (%p169) target = $region20
      $region19: #{medusa_v1_forward.2} parent=5 // pred_region
        // Predicated region
        $region21: #{medusa_v1_forward.2} parent=19 // pred_check
          %p172 = pneg %p80
        $region22: #{medusa_v1_forward.2} parent=19 // pred_check_branch
          %174 = sbr.rel (%p172) target = $region24
        $region23: #{medusa_v1_forward.2} parent=19 // pred_region
          %s175 = sand.u32 %s16, 1
          %s176 = scalar_lea.sflag [#allocation8], %s175
          %s177 = sand.u32 %s70, 1
          %s178 = smul.addr %s177, 128
          %s179 = scalar_lea.vmem [#allocation7], %s178
          %s181 = ssub.s32 2048, 2048
          %182 = vsyncadd %s176, %s181
          %s183 = smul.addr %s24, 64
          %s184 = sadd.s32 %s25, %s183
          %s185 = smul.addr %s23, 128
          %s186 = sadd.s32 %s184, %s185
          %s187 = smul.addr %s186, 64
          %s188 = scalar_lea.hbm %s1, %s187
          %s189 = sshll.u32 %s179, 4
          %s190 = int_to_ptr.vmem [resolvable:$true] %s189
          %195 = dma.hbm_to_vmem [thread:$0]  %s188, 2048, %s190, %s176, 128, 64, 4
        $region24: #{medusa_v1_forward.2} parent=19 // pred_fallthru
          _
        // Predicated region
        $region25: #{medusa_v1_forward.2} parent=19 // pred_check
          %p196 = pneg %p110
        $region26: #{medusa_v1_forward.2} parent=19 // pred_check_branch
          %198 = sbr.rel (%p196) target = $region28
        $region27: #{medusa_v1_forward.2} parent=19 // pred_region
          %s199 = sand.u32 %s16, 1
          %s200 = scalar_lea.sflag [#allocation8], %s199
          %s201 = sand.u32 %s100, 1
          %s202 = scalar_lea.vmem [#allocation9], %s201
          %s204 = ssub.s32 16, 16
          %205 = vsyncadd %s200, %s204
          %s206 = smul.addr %s24, 2
          %s207 = sadd.s32 %s25, %s206
          %s208 = smul.addr %s23, 4
          %s209 = sadd.s32 %s207, %s208
          %s210 = smul.addr %s209, 16
          %s211 = scalar_lea.hbm %s2, %s210
          %s213 = sshll.u32 %s202, 4
          %s214 = int_to_ptr.vmem [resolvable:$true] %s213
          %216 = dma.hbm_to_vmem [thread:$0]  %s211, 16, %s214, %s200
        $region28: #{medusa_v1_forward.2} parent=19 // pred_fallthru
          _
      $region20: #{medusa_v1_forward.2} parent=5 // pred_fallthru
        _
      %p217 = scmp.le.s32.totalorder 1, %s16
      %p218 = scmp.lt.s32.totalorder %s16, 13
      %p219 = pnand %p217, %p218
      %p220 = pneg %p219
      // Predicated region
      $region29: #{medusa_v1_forward.2} parent=5 // pred_check
        _
      $region30: #{medusa_v1_forward.2} parent=5 // pred_check_branch
        %222 = sbr.rel (%p219) target = $region32
      $region31: #{medusa_v1_forward.2} parent=5 // pred_region
        %s223 = ssub.s32 %s16, 1
        // Predicated region
        $region33: #{medusa_v1_forward.2} parent=31 // pred_check
          %p224 = pneg %p56
        $region34: #{medusa_v1_forward.2} parent=31 // pred_check_branch
          %226 = sbr.rel (%p224) target = $region36
        $region35: #{medusa_v1_forward.2} parent=31 // pred_region
          %227 = dma.done [#allocation5], 256
        $region36: #{medusa_v1_forward.2} parent=31 // pred_fallthru
          _
        %s228 = sand.u32 %s21, 1
        %s229 = scalar_lea.sflag [#allocation8], %s228
        %s230 = sand.u32 %s73, 1
        %s231 = smul.addr %s230, 128
        %s232 = scalar_lea.vmem [#allocation7], %s231
        // Predicated region
        $region37: #{medusa_v1_forward.2} parent=31 // pred_check
          %p233 = pneg %p86
        $region38: #{medusa_v1_forward.2} parent=31 // pred_check_branch
          %235 = sbr.rel (%p233) target = $region40
        $region39: #{medusa_v1_forward.2} parent=31 // pred_region
          %236 = dma.done %s229, 2048
        $region40: #{medusa_v1_forward.2} parent=31 // pred_fallthru
          _
        %s237 = sand.u32 %s21, 1
        %s238 = scalar_lea.sflag [#allocation8], %s237
        %s239 = sand.u32 %s103, 1
        %s240 = scalar_lea.vmem [#allocation9], %s239
        // Predicated region
        $region41: #{medusa_v1_forward.2} parent=31 // pred_check
          %p241 = pneg %p116
        $region42: #{medusa_v1_forward.2} parent=31 // pred_check_branch
          %243 = sbr.rel (%p241) target = $region44
        $region43: #{medusa_v1_forward.2} parent=31 // pred_region
          %244 = dma.done %s238, 16
        $region44: #{medusa_v1_forward.2} parent=31 // pred_fallthru
          _
        %p245 = pneg %p56
        %p246 = pneg %p53
        %s247 = sand.u32 %s21, 1
        %s248 = scalar_lea.sflag [#allocation8], %s247
        %s249 = sand.u32 %s73, 1
        %s250 = smul.addr %s249, 128
        %s251 = scalar_lea.vmem [#allocation7], %s250
        %p252 = pneg %p86
        %p253 = pneg %p83
        %s254 = sand.u32 %s21, 1
        %s255 = scalar_lea.sflag [#allocation8], %s254
        %s256 = sand.u32 %s103, 1
        %s257 = scalar_lea.vmem [#allocation9], %s256
        %p258 = pneg %p116
        %p259 = pneg %p113
        %p260 = pneg %p142
        %p261 = pneg %p139
        %s262 = sand.u32 %s129, 1
        %s263 = scalar_lea.sflag [#allocation6], %s262
        %s264 = sand.u32 %s129, 1
        %s265 = smul.addr %s264, 8
        %s266 = scalar_lea.vmem [#allocation10], %s265
        %p268 = scmp.eq.s32.totalorder %s27, 0
        %p269 = scmp.eq.s32.totalorder %s28, 0
        %p270 = pnand %p268, %p269
        %p271 = pneg %p270
        // Predicated region
        $region45: #{medusa_v1_forward.2} parent=31 // pred_check
          _
        $region46: #{medusa_v1_forward.2} parent=31 // pred_check_branch
          %273 = sbr.rel (%p270) target = $region48
        $region47: #{medusa_v1_forward.2} parent=31 // pred_region
          %v274 = vld [vmem:[#allocation4] sm:$0xff]
          %v275 = vld [vmem:[#allocation4 + $0x8] sm:$0xff]
          %276 = vst [vmem:[#allocation2] sm:$0xff] %v274
          %277 = vst [vmem:[#allocation2 + $0x8] sm:$0xff] %v275
        $region48: #{medusa_v1_forward.2} parent=31 // pred_fallthru
          _
        %s278 = smul.u32 %s28, 128
        %v279 = vld [vmem:[#allocation2] sm:$0xff]
        %v280 = vld [vmem:[#allocation2 + $0x8] sm:$0xff]
        %v281 = vpack.c.bf16 %v279, %v279
        %v282 = vpack.c.bf16 %v280, %v280
        %v283 = vld [vmem:[%s232] sm:$0xf]
        %v284 = vld [vmem:[%s232 + $0x4] sm:$0xf]
        %v285 = vld [vmem:[%s232 + $0x8] sm:$0xf]
        %v286 = vld [vmem:[%s232 + $0xc] sm:$0xf]
        %v287 = vld [vmem:[%s232 + $0x10] sm:$0xf]
        %v288 = vld [vmem:[%s232 + $0x14] sm:$0xf]
        %v289 = vld [vmem:[%s232 + $0x18] sm:$0xf]
        %v290 = vld [vmem:[%s232 + $0x1c] sm:$0xf]
        %v291 = vld [vmem:[%s232 + $0x20] sm:$0xf]
        %v292 = vld [vmem:[%s232 + $0x24] sm:$0xf]
        %v293 = vld [vmem:[%s232 + $0x28] sm:$0xf]
        %v294 = vld [vmem:[%s232 + $0x2c] sm:$0xf]
        %v295 = vld [vmem:[%s232 + $0x30] sm:$0xf]
        %v296 = vld [vmem:[%s232 + $0x34] sm:$0xf]
        %v297 = vld [vmem:[%s232 + $0x38] sm:$0xf]
        %v298 = vld [vmem:[%s232 + $0x3c] sm:$0xf]
        %v299 = vld [vmem:[%s232 + $0x40] sm:$0xf]
        %v300 = vld [vmem:[%s232 + $0x44] sm:$0xf]
        %v301 = vld [vmem:[%s232 + $0x48] sm:$0xf]
        %v302 = vld [vmem:[%s232 + $0x4c] sm:$0xf]
        %v303 = vld [vmem:[%s232 + $0x50] sm:$0xf]
        %v304 = vld [vmem:[%s232 + $0x54] sm:$0xf]
        %v305 = vld [vmem:[%s232 + $0x58] sm:$0xf]
        %v306 = vld [vmem:[%s232 + $0x5c] sm:$0xf]
        %v307 = vld [vmem:[%s232 + $0x60] sm:$0xf]
        %v308 = vld [vmem:[%s232 + $0x64] sm:$0xf]
        %v309 = vld [vmem:[%s232 + $0x68] sm:$0xf]
        %v310 = vld [vmem:[%s232 + $0x6c] sm:$0xf]
        %v311 = vld [vmem:[%s232 + $0x70] sm:$0xf]
        %v312 = vld [vmem:[%s232 + $0x74] sm:$0xf]
        %v313 = vld [vmem:[%s232 + $0x78] sm:$0xf]
        %v314 = vld [vmem:[%s232 + $0x7c] sm:$0xf]
        %v315 = vld [vmem:[%s240] sm:$0x1]
        %v317 = vlaneseq
        %v318 = vshrl.u32 %v317, 7
        %v319 = vsub.s32 0, %v318
        %v320 = vrot.slane %v315, %v319
        %v354 = vunpack.c.l.b16 %v283
        %v355 = vunpack.c.l.b16 %v284
        %v356 = vunpack.c.l.b16 %v285
        %v357 = vunpack.c.l.b16 %v286
        %v358 = vunpack.c.l.b16 %v287
        %v359 = vunpack.c.l.b16 %v288
        %v360 = vunpack.c.l.b16 %v289
        %v361 = vunpack.c.l.b16 %v290
        %v362 = vunpack.c.l.b16 %v291
        %v363 = vunpack.c.l.b16 %v292
        %v364 = vunpack.c.l.b16 %v293
        %v365 = vunpack.c.l.b16 %v294
        %v366 = vunpack.c.l.b16 %v295
        %v367 = vunpack.c.l.b16 %v296
        %v368 = vunpack.c.l.b16 %v297
        %v369 = vunpack.c.l.b16 %v298
        %v370 = vunpack.c.l.b16 %v299
        %v371 = vunpack.c.l.b16 %v300
        %v372 = vunpack.c.l.b16 %v301
        %v373 = vunpack.c.l.b16 %v302
        %v374 = vunpack.c.l.b16 %v303
        %v375 = vunpack.c.l.b16 %v304
        %v376 = vunpack.c.l.b16 %v305
        %v377 = vunpack.c.l.b16 %v306
        %v378 = vunpack.c.l.b16 %v307
        %v379 = vunpack.c.l.b16 %v308
        %v380 = vunpack.c.l.b16 %v309
        %v381 = vunpack.c.l.b16 %v310
        %v382 = vunpack.c.l.b16 %v311
        %v383 = vunpack.c.l.b16 %v312
        %v384 = vunpack.c.l.b16 %v313
        %v385 = vunpack.c.l.b16 %v314
        %v386 = vpack.c.b16 %v355, %v354
        %v387 = vpack.c.b16 %v357, %v356
        %v388 = vpack.c.b16 %v359, %v358
        %v389 = vpack.c.b16 %v361, %v360
        %v390 = vpack.c.b16 %v363, %v362
        %v391 = vpack.c.b16 %v365, %v364
        %v392 = vpack.c.b16 %v367, %v366
        %v393 = vpack.c.b16 %v369, %v368
        %v394 = vpack.c.b16 %v371, %v370
        %v395 = vpack.c.b16 %v373, %v372
        %v396 = vpack.c.b16 %v375, %v374
        %v397 = vpack.c.b16 %v377, %v376
        %v398 = vpack.c.b16 %v379, %v378
        %v399 = vpack.c.b16 %v381, %v380
        %v400 = vpack.c.b16 %v383, %v382
        %v401 = vpack.c.b16 %v385, %v384
        %418 = vmatprep.subr.bf16.mxu0 0
        %419 = vmatpush1.bf16.msra.mxu0 %v386
        %420 = vmatprep.subr.bf16.mxu0 0
        %421 = vmatpush1.bf16.msra.mxu0 %v387
        %422 = vmatprep.subr.bf16.mxu0 0
        %423 = vmatpush1.bf16.msra.mxu0 %v388
        %424 = vmatprep.subr.bf16.mxu0 0
        %425 = vmatpush1.bf16.msra.mxu0 %v389
        %426 = vmatprep.subr.bf16.mxu0 0
        %427 = vmatpush1.bf16.msra.mxu0 %v390
        %428 = vmatprep.subr.bf16.mxu0 0
        %429 = vmatpush1.bf16.msra.mxu0 %v391
        %430 = vmatprep.subr.bf16.mxu0 0
        %431 = vmatpush1.bf16.msra.mxu0 %v392
        %432 = vmatprep.subr.bf16.mxu0 0
        %433 = vmatpush1.bf16.msra.mxu0 %v393
        %434 = vmatprep.subr.bf16.mxu0 0
        %435 = vmatpush1.bf16.msra.mxu0 %v394
        %436 = vmatprep.subr.bf16.mxu0 0
        %437 = vmatpush1.bf16.msra.mxu0 %v395
        %438 = vmatprep.subr.bf16.mxu0 0
        %439 = vmatpush1.bf16.msra.mxu0 %v396
        %440 = vmatprep.subr.bf16.mxu0 0
        %441 = vmatpush1.bf16.msra.mxu0 %v397
        %442 = vmatprep.subr.bf16.mxu0 0
        %443 = vmatpush1.bf16.msra.mxu0 %v398
        %444 = vmatprep.subr.bf16.mxu0 0
        %445 = vmatpush1.bf16.msra.mxu0 %v399
        %446 = vmatprep.subr.bf16.mxu0 0
        %447 = vmatpush1.bf16.msra.mxu0 %v400
        %448 = vmatprep.subr.bf16.mxu0 0
        %449 = vmatpush1.bf16.msra.mxu0 %v401
        %450 = vmatprep.mubr.bf16.mxu0 %v282
        %451 = vmatmul.mubr.bf16.gmra.mrb[0].mxu0 %v281
        %v452 = vpop.f32.mrb[0].mxu0
        %v453 = vadd.f32 %v320, %v452
        %v454 = vpop.f32.mrb[0].mxu0
        %v455 = vpop.f32.mrb[0].mxu0
        %v456 = vpop.f32.mrb[0].mxu0
        %457 = vdwg.mxu0
        %s458 = sshra.s32 %s278, 7
        %s459 = sand.u32 %s278, 127
        %s460 = smul.addr %s458, 8
        %s461 = scalar_lea.vmem [#allocation2], %s460
        %v462 = vld [vmem:[%s461] sm:$0xff]
        %v463 = vxor.u32 %v453, 2147483648
        %v464 = vmul.f32 %v463, 1.442695
        %v465 = vpow.pop %v464
        %v466 = vadd.f32 %v465, 1.0
        %v467 = vrcp.pop %v466
        %v468 = vmul.f32 1.0, %v467
        %v469 = vmul.f32 %v453, %v468
        %v470 = vadd.f32 %v462, %v469
        %s471 = smul.addr %s458, 8
        %s472 = scalar_lea.vmem [#allocation3], %s471
        %473 = vst [vmem:[%s472] sm:$0xff] %v470
        %p474 = scmp.eq.s32.totalorder %s28, 1
        // Predicated region
        $region49: #{medusa_v1_forward.2} parent=31 // pred_check
          %p475 = pneg %p474
        $region50: #{medusa_v1_forward.2} parent=31 // pred_check_branch
          %477 = sbr.rel (%p475) target = $region52
        $region51: #{medusa_v1_forward.2} parent=31 // pred_region
          %v478 = vld [vmem:[#allocation3] sm:$0xff]
          %v479 = vld [vmem:[#allocation3 + $0x8] sm:$0xff]
          %480 = vst [vmem:[#allocation2] sm:$0xff] %v478
          %481 = vst [vmem:[#allocation2 + $0x8] sm:$0xff] %v479
        $region52: #{medusa_v1_forward.2} parent=31 // pred_fallthru
          _
        %p482 = scmp.eq.s32.totalorder %s27, 1
        %p483 = pnand %p482, %p474
        %p484 = pneg %p483
        // Predicated region
        $region53: #{medusa_v1_forward.2} parent=31 // pred_check
          _
        $region54: #{medusa_v1_forward.2} parent=31 // pred_check_branch
          %486 = sbr.rel (%p483) target = $region56
        $region55: #{medusa_v1_forward.2} parent=31 // pred_region
          %v487 = vld [vmem:[#allocation3] sm:$0xff]
          %v488 = vld [vmem:[#allocation3 + $0x8] sm:$0xff]
          %v489 = vpack.c.bf16 %v487, %v487
          %v490 = vpack.c.bf16 %v488, %v488
          %v493 = vunpack.c.l.b16 %v489
          %v494 = vunpack.c.l.b16 %v490
          %v495 = vpack.c.b16 %v494, %v493
          %497 = vst [vmem:[%s266] sm:$0xff] %v495
        $region56: #{medusa_v1_forward.2} parent=31 // pred_fallthru
          _
        %s498 = sand.u32 %s129, 1
        %s499 = scalar_lea.sflag [#allocation6], %s498
        %s500 = sand.u32 %s129, 1
        %s501 = smul.addr %s500, 8
        %s502 = scalar_lea.vmem [#allocation10], %s501
        // Predicated region
        $region57: #{medusa_v1_forward.2} parent=31 // pred_check
          %p503 = pneg %p139
        $region58: #{medusa_v1_forward.2} parent=31 // pred_check_branch
          %505 = sbr.rel (%p503) target = $region60
        $region59: #{medusa_v1_forward.2} parent=31 // pred_region
          %s507 = ssub.s32 128, 128
          %508 = vsyncadd %s499, %s507
          %s509 = smul.addr %s26, 2
          %s510 = smul.addr %s509, 64
          %s511 = scalar_lea.hbm %s3, %s510
          %s513 = sshll.u32 %s502, 4
          %s514 = int_to_ptr.vmem [resolvable:$true] %s513
          %516 = dma.vmem_to_hbm [thread:$0]  %s514, 128, %s511, %s499
        $region60: #{medusa_v1_forward.2} parent=31 // pred_fallthru
          _
      $region32: #{medusa_v1_forward.2} parent=5 // pred_fallthru
        _
      %p517 = scmp.le.s32.totalorder 2, %s16
      // Predicated region
      $region61: #{medusa_v1_forward.2} parent=5 // pred_check
        %p518 = pneg %p517
      $region62: #{medusa_v1_forward.2} parent=5 // pred_check_branch
        %520 = sbr.rel (%p518) target = $region64
      $region63: #{medusa_v1_forward.2} parent=5 // pred_region
        %s521 = ssub.s32 %s16, 2
        // Predicated region
        $region65: #{medusa_v1_forward.2} parent=63 // pred_check
          %p522 = pneg %p145
        $region66: #{medusa_v1_forward.2} parent=63 // pred_check_branch
          %524 = sbr.rel (%p522) target = $region68
        $region67: #{medusa_v1_forward.2} parent=63 // pred_region
          %s525 = sand.u32 %s130, 1
          %s526 = scalar_lea.sflag [#allocation6], %s525
          %s527 = sand.u32 %s130, 1
          %s528 = smul.addr %s527, 8
          %s529 = scalar_lea.vmem [#allocation10], %s528
          %530 = dma.done %s526, 128
        $region68: #{medusa_v1_forward.2} parent=63 // pred_fallthru
          _
      $region64: #{medusa_v1_forward.2} parent=5 // pred_fallthru
        _
    $region6: #{medusa_v1_forward.2} parent=1 // loop_footer
      %s20 = sadd.s32 1, %s16
    $region7: #{medusa_v1_forward.2} parent=1 // loop_footer_branch
      %15 = sbr.rel target = $region3
    $region8: #{medusa_v1_forward.2} parent=1 // loop_exit
      _
    %531 = vsyncpa [#allocation5], 1
    %s532 = scalar_lea.sflag [#allocation5], 1
    %533 = vsyncpa %s532, 1
    %534 = vsyncpa [#allocation8], 1
    %s535 = scalar_lea.sflag [#allocation8], 1
    %536 = vsyncpa %s535, 1
    %537 = vsyncpa [#allocation6], 1
    %s538 = scalar_lea.sflag [#allocation6], 1
    %539 = vsyncpa %s538, 1

// kernel: medusa_v1_forward.3
$region0: #{medusa_v1_forward.3}
  #allocation0 [shape = 'u32[]', space=smem, size = 0x4, offset = 0x4, fixed_abs, tag = 'smem constant byte address 0x4 - core index']
  #allocation1 [shape = 'u32[144,128]{1,0:T(1,128)}', space=vmem, size = 0x12000, scoped, tag = 'internal scratch']
  %s0 = inlined_call_operand.hbm [shape: bf16[4,8,256], index: 0, kind: input, shape index: {}]
  %s1 = inlined_call_operand.hbm [shape: bf16[4,256,1024], index: 1, kind: input, shape index: {}]
  %s2 = inlined_call_operand.hbm [shape: f32[8,4096], index: 2, kind: output, shape index: {}]
  %s3 = sld [smem:[#allocation0]]
  $region49: #{medusa_v1_forward.3} parent=0
    _
  %s5 = ssub.s32 1, %s3
  %s6 = scalar_select 0, %s5, %s3
  $region1: #{medusa_v1_forward.3} parent=0
    #allocation2 [shape = 'u8[8192]{0}', space=vmem, size = 0x2000, scoped, tag = 'input window, operand 0']
    #allocation3 [shape = 's32[2]{0}', space=sflag, size = 0x8, scoped, tag = 'scoped memory for medusa_v1_forward.3']
    #allocation4 [shape = 's32[2]{0}', space=sflag, size = 0x8, scoped, tag = 'scoped memory for medusa_v1_forward.3']
    #allocation5 [shape = 'u8[262144]{0}', space=vmem, size = 0x40000, scoped, tag = 'input window, operand 1']
    #allocation6 [shape = 's32[2]{0}', space=sflag, size = 0x8, scoped, tag = 'scoped memory for medusa_v1_forward.3']
    #allocation7 [shape = 'u8[16384]{0}', space=vmem, size = 0x4000, scoped, tag = 'output window, operand 0']
    %7 = vsyncpa [#allocation3], 0
    %s8 = scalar_lea.sflag [#allocation3], 1
    %9 = vsyncpa %s8, 0
    %10 = vsyncpa [#allocation6], 0
    %s11 = scalar_lea.sflag [#allocation6], 1
    %12 = vsyncpa %s11, 0
    %13 = vsyncpa [#allocation4], 0
    %s14 = scalar_lea.sflag [#allocation4], 1
    %15 = vsyncpa %s14, 0
    loop: start=0, step=1, limit=18
    $region2: #{medusa_v1_forward.3} parent=1 // loop_pre_header
      _
    $region3: #{medusa_v1_forward.3} parent=1 // loop_header
      %s17 = sphi 0, %s21
      %p18 = scmp.ge.s32.totalorder %s17, 18
      %s24 = sphi 0, %s36
      %s25 = sphi 0, %s32
      %s26 = sphi 0, %s24
      %s27 = sphi 0, %s25
      %s28 = sphi 0, %s26
      %s29 = sphi 0, %s27
      %s39 = sphi 0, %s41
      %s42 = sphi 0, %s39
      %s43 = sphi 0, %s42
      %s59 = sphi 0, %s43
      %s67 = sphi 0, %s69
      %s70 = sphi 0, %s67
      %s71 = sphi 0, %s70
      %s87 = sphi 0, %s71
      %s97 = sphi 0, %s99
      %s100 = sphi 0, %s97
      %s101 = sphi 0, %s100
      %s117 = sphi 0, %s101
    $region4: #{medusa_v1_forward.3} parent=1 // loop_header_branch
      %20 = sbr.rel (%p18) target = $region8
    $region5: #{medusa_v1_forward.3} parent=1 // loop_body
      %s22 = ssub.s32 %s17, 1
      %s23 = ssub.s32 %s17, 2
      %s30 = sadd.s32 1, %s25
      %p31 = scmp.ge.s32.totalorder %s30, 4
      %s32 = scalar_select %p31, 0, %s30
      %s33 = sadd.s32 1, %s24
      %s34 = scalar_select %p31, %s33, %s24
      %p35 = scmp.ge.s32.totalorder %s34, 4
      %s36 = scalar_select %p35, 0, %s34
      %s37 = ssub.s32 %s24, %s36
      %p38 = scmp.eq.s32.totalorder %s37, 0
      %s40 = sadd.s32 %s39, 1
      %s41 = scalar_select %p38, %s39, %s40
      %p44 = pneg %p38
      %p45 = scmp.eq.s32.totalorder %s17, 15
      %p46 = por %p44, %p45
      %p47 = scmp.ne.s32.totalorder %s39, %s42
      %p48 = scmp.eq.s32.totalorder %s17, 0
      %p49 = por %p47, %p48
      %p50 = scmp.ne.s32.totalorder %s39, %s42
      %p51 = scmp.eq.s32.totalorder %s22, 15
      %p52 = por %p50, %p51
      %p53 = scmp.ne.s32.totalorder %s42, %s43
      %p54 = scmp.eq.s32.totalorder %s22, 0
      %p55 = por %p53, %p54
      %p56 = scmp.ne.s32.totalorder %s42, %s43
      %p57 = scmp.eq.s32.totalorder %s23, 15
      %p58 = por %p56, %p57
      %p60 = scmp.ne.s32.totalorder %s43, %s59
      %p61 = scmp.eq.s32.totalorder %s23, 0
      %p62 = por %p60, %p61
      %s63 = ssub.s32 %s24, %s36
      %s64 = ssub.s32 %s25, %s32
      %s65 = sor.u32 %s63, %s64
      %p66 = scmp.eq.s32.totalorder %s65, 0
      %s68 = sadd.s32 %s67, 1
      %s69 = scalar_select %p66, %s67, %s68
      %p72 = pneg %p66
      %p73 = scmp.eq.s32.totalorder %s17, 15
      %p74 = por %p72, %p73
      %p75 = scmp.ne.s32.totalorder %s67, %s70
      %p76 = scmp.eq.s32.totalorder %s17, 0
      %p77 = por %p75, %p76
      %p78 = scmp.ne.s32.totalorder %s67, %s70
      %p79 = scmp.eq.s32.totalorder %s22, 15
      %p80 = por %p78, %p79
      %p81 = scmp.ne.s32.totalorder %s70, %s71
      %p82 = scmp.eq.s32.totalorder %s22, 0
      %p83 = por %p81, %p82
      %p84 = scmp.ne.s32.totalorder %s70, %s71
      %p85 = scmp.eq.s32.totalorder %s23, 15
      %p86 = por %p84, %p85
      %p88 = scmp.ne.s32.totalorder %s71, %s87
      %p89 = scmp.eq.s32.totalorder %s23, 0
      %p90 = por %p88, %p89
      %s91 = smul.u32 %s24, 4
      %s92 = sadd.s32 %s91, %s25
      %s93 = smul.u32 %s36, 4
      %s94 = sadd.s32 %s93, %s32
      %s95 = ssub.s32 %s92, %s94
      %p96 = scmp.eq.s32.totalorder %s95, 0
      %s98 = sadd.s32 %s97, 1
      %s99 = scalar_select %p96, %s97, %s98
      %p102 = pneg %p96
      %p103 = scmp.eq.s32.totalorder %s17, 15
      %p104 = por %p102, %p103
      %p105 = scmp.ne.s32.totalorder %s97, %s100
      %p106 = scmp.eq.s32.totalorder %s17, 0
      %p107 = por %p105, %p106
      %p108 = scmp.ne.s32.totalorder %s97, %s100
      %p109 = scmp.eq.s32.totalorder %s22, 15
      %p110 = por %p108, %p109
      %p111 = scmp.ne.s32.totalorder %s100, %s101
      %p112 = scmp.eq.s32.totalorder %s22, 0
      %p113 = por %p111, %p112
      %p114 = scmp.ne.s32.totalorder %s100, %s101
      %p115 = scmp.eq.s32.totalorder %s23, 15
      %p116 = por %p114, %p115
      %p118 = scmp.ne.s32.totalorder %s101, %s117
      %p119 = scmp.eq.s32.totalorder %s23, 0
      %p120 = por %p118, %p119
      %p121 = scmp.le.s32.totalorder 1, %s17
      %p122 = scmp.lt.s32.totalorder %s17, 17
      %p123 = pnand %p121, %p122
      %p124 = pneg %p123
      // Predicated region
      $region9: #{medusa_v1_forward.3} parent=5 // pred_check
        _
      $region10: #{medusa_v1_forward.3} parent=5 // pred_check_branch
        %126 = sbr.rel (%p123) target = $region12
      $region11: #{medusa_v1_forward.3} parent=5 // pred_region
        %s127 = ssub.s32 %s17, 1
      $region12: #{medusa_v1_forward.3} parent=5 // pred_fallthru
        _
      %p128 = scmp.lt.s32.totalorder %s17, 16
      // Predicated region
      $region13: #{medusa_v1_forward.3} parent=5 // pred_check
        %p129 = pneg %p128
      $region14: #{medusa_v1_forward.3} parent=5 // pred_check_branch
        %131 = sbr.rel (%p129) target = $region16
      $region15: #{medusa_v1_forward.3} parent=5 // pred_region
        // Predicated region
        $region17: #{medusa_v1_forward.3} parent=15 // pred_check
          %p132 = pneg %p49
        $region18: #{medusa_v1_forward.3} parent=15 // pred_check_branch
          %134 = sbr.rel (%p132) target = $region20
        $region19: #{medusa_v1_forward.3} parent=15 // pred_region
          %s135 = sand.u32 %s39, 1
          %s136 = scalar_lea.sflag [#allocation3], %s135
          %s137 = sand.u32 %s39, 1
          %s138 = smul.addr %s137, 8
          %s139 = scalar_lea.vmem [#allocation2], %s138
          %s141 = ssub.s32 128, 128
          %142 = vsyncadd %s136, %s141
          %s143 = smul.addr %s24, 2
          %s144 = smul.addr %s143, 64
          %s145 = scalar_lea.hbm %s0, %s144
          %s147 = sshll.u32 %s139, 4
          %s148 = int_to_ptr.vmem [resolvable:$true] %s147
          %150 = dma.hbm_to_vmem [thread:$0]  %s145, 128, %s148, %s136
        $region20: #{medusa_v1_forward.3} parent=15 // pred_fallthru
          _
        // Predicated region
        $region21: #{medusa_v1_forward.3} parent=15 // pred_check
          %p151 = pneg %p77
        $region22: #{medusa_v1_forward.3} parent=15 // pred_check_branch
          %153 = sbr.rel (%p151) target = $region24
        $region23: #{medusa_v1_forward.3} parent=15 // pred_region
          %s154 = sand.u32 %s67, 1
          %s155 = scalar_lea.sflag [#allocation6], %s154
          %s156 = sand.u32 %s67, 1
          %s157 = smul.addr %s156, 256
          %s158 = scalar_lea.vmem [#allocation5], %s157
          %s159 = smul.u32 2, %s25
          %s161 = ssub.s32 4096, 4096
          %162 = vsyncadd %s155, %s161
          %s163 = smul.addr %s24, 256
          %s164 = sadd.s32 %s159, %s163
          %s165 = smul.addr %s164, 64
          %s166 = scalar_lea.hbm %s1, %s165
          %s167 = sshll.u32 %s158, 4
          %s168 = int_to_ptr.vmem [resolvable:$true] %s167
          %173 = dma.hbm_to_vmem [thread:$0]  %s166, 4096, %s168, %s155, 512, 128, 8
        $region24: #{medusa_v1_forward.3} parent=15 // pred_fallthru
          _
      $region16: #{medusa_v1_forward.3} parent=5 // pred_fallthru
        _
      %p174 = scmp.le.s32.totalorder 1, %s17
      %p175 = scmp.lt.s32.totalorder %s17, 17
      %p176 = pnand %p174, %p175
      %p177 = pneg %p176
      // Predicated region
      $region25: #{medusa_v1_forward.3} parent=5 // pred_check
        _
      $region26: #{medusa_v1_forward.3} parent=5 // pred_check_branch
        %179 = sbr.rel (%p176) target = $region28
      $region27: #{medusa_v1_forward.3} parent=5 // pred_region
        %s180 = ssub.s32 %s17, 1
        %s181 = sand.u32 %s42, 1
        %s182 = scalar_lea.sflag [#allocation3], %s181
        %s183 = sand.u32 %s42, 1
        %s184 = smul.addr %s183, 8
        %s185 = scalar_lea.vmem [#allocation2], %s184
        // Predicated region
        $region29: #{medusa_v1_forward.3} parent=27 // pred_check
          %p186 = pneg %p55
        $region30: #{medusa_v1_forward.3} parent=27 // pred_check_branch
          %188 = sbr.rel (%p186) target = $region32
        $region31: #{medusa_v1_forward.3} parent=27 // pred_region
          %189 = dma.done %s182, 128
        $region32: #{medusa_v1_forward.3} parent=27 // pred_fallthru
          _
        %s190 = sand.u32 %s70, 1
        %s191 = scalar_lea.sflag [#allocation6], %s190
        %s192 = sand.u32 %s70, 1
        %s193 = smul.addr %s192, 256
        %s194 = scalar_lea.vmem [#allocation5], %s193
        // Predicated region
        $region33: #{medusa_v1_forward.3} parent=27 // pred_check
          %p195 = pneg %p83
        $region34: #{medusa_v1_forward.3} parent=27 // pred_check_branch
          %197 = sbr.rel (%p195) target = $region36
        $region35: #{medusa_v1_forward.3} parent=27 // pred_region
          %198 = dma.done %s191, 4096
        $region36: #{medusa_v1_forward.3} parent=27 // pred_fallthru
          _
        %s199 = sand.u32 %s42, 1
        %s200 = scalar_lea.sflag [#allocation3], %s199
        %s201 = sand.u32 %s42, 1
        %s202 = smul.addr %s201, 8
        %s203 = scalar_lea.vmem [#allocation2], %s202
        %p204 = pneg %p55
        %p205 = pneg %p52
        %s206 = sand.u32 %s70, 1
        %s207 = scalar_lea.sflag [#allocation6], %s206
        %s208 = sand.u32 %s70, 1
        %s209 = smul.addr %s208, 256
        %s210 = scalar_lea.vmem [#allocation5], %s209
        %p211 = pneg %p83
        %p212 = pneg %p80
        %p213 = pneg %p113
        %p214 = pneg %p110
        %s215 = sand.u32 %s100, 1
        %s216 = scalar_lea.sflag [#allocation4], %s215
        %s217 = sand.u32 %s100, 1
        %s218 = smul.addr %s217, 16
        %s219 = scalar_lea.vmem [#allocation7], %s218
        %s220 = smul.u32 2, %s27
        %s221 = smul.u32 %s26, 4
        %s222 = sadd.s32 %s221, %s27
        %s223 = smul.u32 2, %s222
        %v224 = vld [vmem:[%s185] sm:$0xff]
        %v225 = vld [vmem:[%s194] sm:$0xff]
        %v226 = vld [vmem:[%s194 + $0x8] sm:$0xff]
        %v227 = vld [vmem:[%s194 + $0x10] sm:$0xff]
        %v228 = vld [vmem:[%s194 + $0x18] sm:$0xff]
        %v229 = vld [vmem:[%s194 + $0x20] sm:$0xff]
        %v230 = vld [vmem:[%s194 + $0x28] sm:$0xff]
        %v231 = vld [vmem:[%s194 + $0x30] sm:$0xff]
        %v232 = vld [vmem:[%s194 + $0x38] sm:$0xff]
        %v233 = vld [vmem:[%s194 + $0x40] sm:$0xff]
        %v234 = vld [vmem:[%s194 + $0x48] sm:$0xff]
        %v235 = vld [vmem:[%s194 + $0x50] sm:$0xff]
        %v236 = vld [vmem:[%s194 + $0x58] sm:$0xff]
        %v237 = vld [vmem:[%s194 + $0x60] sm:$0xff]
        %v238 = vld [vmem:[%s194 + $0x68] sm:$0xff]
        %v239 = vld [vmem:[%s194 + $0x70] sm:$0xff]
        %v240 = vld [vmem:[%s194 + $0x78] sm:$0xff]
        %v241 = vld [vmem:[%s194 + $0x80] sm:$0xff]
        %v242 = vld [vmem:[%s194 + $0x88] sm:$0xff]
        %v243 = vld [vmem:[%s194 + $0x90] sm:$0xff]
        %v244 = vld [vmem:[%s194 + $0x98] sm:$0xff]
        %v245 = vld [vmem:[%s194 + $0xa0] sm:$0xff]
        %v246 = vld [vmem:[%s194 + $0xa8] sm:$0xff]
        %v247 = vld [vmem:[%s194 + $0xb0] sm:$0xff]
        %v248 = vld [vmem:[%s194 + $0xb8] sm:$0xff]
        %v249 = vld [vmem:[%s194 + $0xc0] sm:$0xff]
        %v250 = vld [vmem:[%s194 + $0xc8] sm:$0xff]
        %v251 = vld [vmem:[%s194 + $0xd0] sm:$0xff]
        %v252 = vld [vmem:[%s194 + $0xd8] sm:$0xff]
        %v253 = vld [vmem:[%s194 + $0xe0] sm:$0xff]
        %v254 = vld [vmem:[%s194 + $0xe8] sm:$0xff]
        %v255 = vld [vmem:[%s194 + $0xf0] sm:$0xff]
        %v256 = vld [vmem:[%s194 + $0xf8] sm:$0xff]
        %v258 = vunpack.c.l.b16 %v224
        %v259 = vunpack.c.h.b16 %v224
        %v260 = vpack.c.b16 %v258, %v258
        %v261 = vpack.c.b16 %v259, %v259
        %v296 = vunpack.c.l.b16 %v225
        %v297 = vunpack.c.h.b16 %v225
        %v298 = vunpack.c.l.b16 %v226
        %v299 = vunpack.c.h.b16 %v226
        %v300 = vunpack.c.l.b16 %v227
        %v301 = vunpack.c.h.b16 %v227
        %v302 = vunpack.c.l.b16 %v228
        %v303 = vunpack.c.h.b16 %v228
        %v304 = vunpack.c.l.b16 %v229
        %v305 = vunpack.c.h.b16 %v229
        %v306 = vunpack.c.l.b16 %v230
        %v307 = vunpack.c.h.b16 %v230
        %v308 = vunpack.c.l.b16 %v231
        %v309 = vunpack.c.h.b16 %v231
        %v310 = vunpack.c.l.b16 %v232
        %v311 = vunpack.c.h.b16 %v232
        %v312 = vunpack.c.l.b16 %v233
        %v313 = vunpack.c.h.b16 %v233
        %v314 = vunpack.c.l.b16 %v234
        %v315 = vunpack.c.h.b16 %v234
        %v316 = vunpack.c.l.b16 %v235
        %v317 = vunpack.c.h.b16 %v235
        %v318 = vunpack.c.l.b16 %v236
        %v319 = vunpack.c.h.b16 %v236
        %v320 = vunpack.c.l.b16 %v237
        %v321 = vunpack.c.h.b16 %v237
        %v322 = vunpack.c.l.b16 %v238
        %v323 = vunpack.c.h.b16 %v238
        %v324 = vunpack.c.l.b16 %v239
        %v325 = vunpack.c.h.b16 %v239
        %v326 = vunpack.c.l.b16 %v240
        %v327 = vunpack.c.h.b16 %v240
        %v328 = vunpack.c.l.b16 %v241
        %v329 = vunpack.c.h.b16 %v241
        %v330 = vunpack.c.l.b16 %v242
        %v331 = vunpack.c.h.b16 %v242
        %v332 = vunpack.c.l.b16 %v243
        %v333 = vunpack.c.h.b16 %v243
        %v334 = vunpack.c.l.b16 %v244
        %v335 = vunpack.c.h.b16 %v244
        %v336 = vunpack.c.l.b16 %v245
        %v337 = vunpack.c.h.b16 %v245
        %v338 = vunpack.c.l.b16 %v246
        %v339 = vunpack.c.h.b16 %v246
        %v340 = vunpack.c.l.b16 %v247
        %v341 = vunpack.c.h.b16 %v247
        %v342 = vunpack.c.l.b16 %v248
        %v343 = vunpack.c.h.b16 %v248
        %v344 = vunpack.c.l.b16 %v249
        %v345 = vunpack.c.h.b16 %v249
        %v346 = vunpack.c.l.b16 %v250
        %v347 = vunpack.c.h.b16 %v250
        %v348 = vunpack.c.l.b16 %v251
        %v349 = vunpack.c.h.b16 %v251
        %v350 = vunpack.c.l.b16 %v252
        %v351 = vunpack.c.h.b16 %v252
        %v352 = vunpack.c.l.b16 %v253
        %v353 = vunpack.c.h.b16 %v253
        %v354 = vunpack.c.l.b16 %v254
        %v355 = vunpack.c.h.b16 %v254
        %v356 = vunpack.c.l.b16 %v255
        %v357 = vunpack.c.h.b16 %v255
        %v358 = vunpack.c.l.b16 %v256
        %v359 = vunpack.c.h.b16 %v256
        %v360 = vpack.c.b16 %v298, %v296
        %v361 = vpack.c.b16 %v299, %v297
        %v362 = vpack.c.b16 %v302, %v300
        %v363 = vpack.c.b16 %v303, %v301
        %v364 = vpack.c.b16 %v306, %v304
        %v365 = vpack.c.b16 %v307, %v305
        %v366 = vpack.c.b16 %v310, %v308
        %v367 = vpack.c.b16 %v311, %v309
        %v368 = vpack.c.b16 %v314, %v312
        %v369 = vpack.c.b16 %v315, %v313
        %v370 = vpack.c.b16 %v318, %v316
        %v371 = vpack.c.b16 %v319, %v317
        %v372 = vpack.c.b16 %v322, %v320
        %v373 = vpack.c.b16 %v323, %v321
        %v374 = vpack.c.b16 %v326, %v324
        %v375 = vpack.c.b16 %v327, %v325
        %v376 = vpack.c.b16 %v330, %v328
        %v377 = vpack.c.b16 %v331, %v329
        %v378 = vpack.c.b16 %v334, %v332
        %v379 = vpack.c.b16 %v335, %v333
        %v380 = vpack.c.b16 %v338, %v336
        %v381 = vpack.c.b16 %v339, %v337
        %v382 = vpack.c.b16 %v342, %v340
        %v383 = vpack.c.b16 %v343, %v341
        %v384 = vpack.c.b16 %v346, %v344
        %v385 = vpack.c.b16 %v347, %v345
        %v386 = vpack.c.b16 %v350, %v348
        %v387 = vpack.c.b16 %v351, %v349
        %v388 = vpack.c.b16 %v354, %v352
        %v389 = vpack.c.b16 %v355, %v353
        %v390 = vpack.c.b16 %v358, %v356
        %v391 = vpack.c.b16 %v359, %v357
        %424 = vmatprep.subr.bf16.mxu0 %v361
        %425 = vmatpush1.bf16.msra.mxu0 %v360
        %426 = vmatprep.subr.bf16.mxu0 %v363
        %427 = vmatpush1.bf16.msra.mxu0 %v362
        %428 = vmatprep.subr.bf16.mxu0 %v365
        %429 = vmatpush1.bf16.msra.mxu0 %v364
        %430 = vmatprep.subr.bf16.mxu0 %v367
        %431 = vmatpush1.bf16.msra.mxu0 %v366
        %432 = vmatprep.subr.bf16.mxu0 %v369
        %433 = vmatpush1.bf16.msra.mxu0 %v368
        %434 = vmatprep.subr.bf16.mxu0 %v371
        %435 = vmatpush1.bf16.msra.mxu0 %v370
        %436 = vmatprep.subr.bf16.mxu0 %v373
        %437 = vmatpush1.bf16.msra.mxu0 %v372
        %438 = vmatprep.subr.bf16.mxu0 %v375
        %439 = vmatpush1.bf16.msra.mxu0 %v374
        %440 = vmatprep.subr.bf16.mxu0 %v377
        %441 = vmatpush1.bf16.msra.mxu0 %v376
        %442 = vmatprep.subr.bf16.mxu0 %v379
        %443 = vmatpush1.bf16.msra.mxu0 %v378
        %444 = vmatprep.subr.bf16.mxu0 %v381
        %445 = vmatpush1.bf16.msra.mxu0 %v380
        %446 = vmatprep.subr.bf16.mxu0 %v383
        %447 = vmatpush1.bf16.msra.mxu0 %v382
        %448 = vmatprep.subr.bf16.mxu0 %v385
        %449 = vmatpush1.bf16.msra.mxu0 %v384
        %450 = vmatprep.subr.bf16.mxu0 %v387
        %451 = vmatpush1.bf16.msra.mxu0 %v386
        %452 = vmatprep.subr.bf16.mxu0 %v389
        %453 = vmatpush1.bf16.msra.mxu0 %v388
        %454 = vmatprep.subr.bf16.mxu0 %v391
        %455 = vmatpush1.bf16.msra.mxu0 %v390
        %456 = vmatprep.mubr.bf16.mxu0 %v261
        %457 = vmatmul.mubr.bf16.gmra.mrb[0].mxu0 %v260
        %v458 = vpop.f32.mrb[0].mxu0
        %v459 = vadd.f32 0.0, %v458
        %v460 = vpop.f32.mrb[0].mxu0
        %v461 = vadd.f32 0.0, %v460
        %v462 = vpop.f32.mrb[0].mxu0
        %v463 = vpop.f32.mrb[0].mxu0
        %464 = vdwg.mxu0
        %465 = vst [vmem:[%s219] sm:$0xff] %v459
        %466 = vst [vmem:[%s219 + $0x8] sm:$0xff] %v461
        %s467 = sand.u32 %s100, 1
        %s468 = scalar_lea.sflag [#allocation4], %s467
        %s469 = sand.u32 %s100, 1
        %s470 = smul.addr %s469, 16
        %s471 = scalar_lea.vmem [#allocation7], %s470
        // Predicated region
        $region37: #{medusa_v1_forward.3} parent=27 // pred_check
          %p472 = pneg %p110
        $region38: #{medusa_v1_forward.3} parent=27 // pred_check_branch
          %474 = sbr.rel (%p472) target = $region40
        $region39: #{medusa_v1_forward.3} parent=27 // pred_region
          %s475 = smul.u32 %s26, 4
          %s476 = sadd.s32 %s475, %s27
          %s477 = smul.u32 2, %s476
          %s479 = ssub.s32 256, 256
          %480 = vsyncadd %s468, %s479
          %s481 = smul.addr %s477, 128
          %s482 = scalar_lea.hbm %s2, %s481
          %s484 = sshll.u32 %s471, 4
          %s485 = int_to_ptr.vmem [resolvable:$true] %s484
          %487 = dma.vmem_to_hbm [thread:$0]  %s485, 256, %s482, %s468
        $region40: #{medusa_v1_forward.3} parent=27 // pred_fallthru
          _
      $region28: #{medusa_v1_forward.3} parent=5 // pred_fallthru
        _
      %p488 = scmp.le.s32.totalorder 2, %s17
      // Predicated region
      $region41: #{medusa_v1_forward.3} parent=5 // pred_check
        %p489 = pneg %p488
      $region42: #{medusa_v1_forward.3} parent=5 // pred_check_branch
        %491 = sbr.rel (%p489) target = $region44
      $region43: #{medusa_v1_forward.3} parent=5 // pred_region
        %s492 = ssub.s32 %s17, 2
        // Predicated region
        $region45: #{medusa_v1_forward.3} parent=43 // pred_check
          %p493 = pneg %p116
        $region46: #{medusa_v1_forward.3} parent=43 // pred_check_branch
          %495 = sbr.rel (%p493) target = $region48
        $region47: #{medusa_v1_forward.3} parent=43 // pred_region
          %s496 = sand.u32 %s101, 1
          %s497 = scalar_lea.sflag [#allocation4], %s496
          %s498 = sand.u32 %s101, 1
          %s499 = smul.addr %s498, 16
          %s500 = scalar_lea.vmem [#allocation7], %s499
          %501 = dma.done %s497, 256
        $region48: #{medusa_v1_forward.3} parent=43 // pred_fallthru
          _
      $region44: #{medusa_v1_forward.3} parent=5 // pred_fallthru
        _
    $region6: #{medusa_v1_forward.3} parent=1 // loop_footer
      %s21 = sadd.s32 1, %s17
    $region7: #{medusa_v1_forward.3} parent=1 // loop_footer_branch
      %16 = sbr.rel target = $region3
    $region8: #{medusa_v1_forward.3} parent=1 // loop_exit
      _
    %502 = vsyncpa [#allocation3], 1
    %s503 = scalar_lea.sflag [#allocation3], 1
    %504 = vsyncpa %s503, 1
    %505 = vsyncpa [#allocation6], 1
    %s506 = scalar_lea.sflag [#allocation6], 1
    %507 = vsyncpa %s506, 1
    %508 = vsyncpa [#allocation4], 1
    %s509 = scalar_lea.sflag [#allocation4], 1
    %510 = vsyncpa %s509, 1

</llo_original>
